<compile_context>
chip_gen: v5e
topology: v5e:2x2
jax: 0.10.0
libtpu: 0.0.40
codegen_flags: <defaults>
</compile_context>

<pallas_src>
import jax
import jax.numpy as jnp
from jax.experimental import pallas as pl
from jax.experimental.pallas import tpu as pltpu

EPS = 1e-5
INV_SQRT2 = 0.7071067811865476  # 1/sqrt(2), hoisted constant for exact GELU


def projection_head_kernel(x_ref, w1_ref, b1_ref, w2_ref, b2_ref,
                           gamma_ref, beta_ref, out_ref):
    x = x_ref[...]                                   # [TB, E], fp32 or bf16
    w1 = w1_ref[...]                                 # [E, P]  (fp32 or bf16)
    b1 = b1_ref[...]                                 # [1, P], fp32
    w2 = w2_ref[...]                                 # [P, P]  (fp32 or bf16)
    b2 = b2_ref[...]                                 # [1, P], fp32
    gamma = gamma_ref[...]                           # [1, P], fp32
    beta = beta_ref[...]                             # [1, P], fp32

    # projection = Linear(embedding_dim, projection_dim); fp32 accumulation on the MXU.
    projected = jnp.dot(x.astype(w1.dtype), w1,
                        preferred_element_type=jnp.float32) + b1          # [TB, P]

    # Exact GELU: 0.5 * x * (1 + erf(x / sqrt(2)))  (nn.GELU() default numerics).
    # (tanh-approx GELU would move this to the EUP, but exact erf matches the spec and the
    #  kernel is HBM-bound at the chosen tile sizes, so this is not on the critical path.)
    g = 0.5 * projected * (1.0 + jax.lax.erf(projected * INV_SQRT2))

    # fc = Linear(projection_dim, projection_dim)
    h = jnp.dot(g.astype(w2.dtype), w2,
                preferred_element_type=jnp.float32) + b2                  # [TB, P]

    # TODO(synk): dropout is identity in eval/inference mode; training-mode stochastic
    # dropout would use pltpu.prng_seed + pltpu.prng_random_bits.
    h = h + projected                                                     # residual

    # LayerNorm over the last (projection) dim, biased variance, eps=1e-5.
    # Two-pass: subtract the mean before the variance reduction (no E[h^2]-mean^2
    # cancellation); the extra XLU reduce is cheap next to the MXU/VPU work.
    mean = jnp.mean(h, axis=-1, keepdims=True)
    centered = h - mean
    var = jnp.mean(centered * centered, axis=-1, keepdims=True)
    normed = centered * jax.lax.rsqrt(var + EPS)
    out_ref[...] = (normed * gamma + beta).astype(out_ref.dtype)


def _round_up(n, m):
    return ((n + m - 1) // m) * m


def projection_head(x, w1, b1, w2, b2, gamma, beta, *,
                    block_rows=None, weight_dtype=None, out_dtype=jnp.float32):
    """Fused ProjectionHead forward.

    block_rows:   batch-tile rows (rounded to the sublane multiple). Default: picks
                  ~ceil(B/2) rows capped at 1024 so (a) tiles are big enough to amortize
                  per-grid-step overhead and (b) grid >= 2 for v7x's two TensorCores.
    weight_dtype: optional dtype for W1/W2 (e.g. jnp.bfloat16). On a sub-fp32 dtype, x is
                  streamed in that dtype too (halves x HBM traffic); accumulation and the
                  epilogue stay fp32. Default fp32 to match nn.Linear numerics.
    out_dtype:    output dtype (bf16 halves output HBM traffic if the consumer accepts it).
    """
    B, E = x.shape
    P = w1.shape[1]

    # Streamed-activation dtype: follow the weight dtype when it is narrower than fp32.
    stream_dtype = jnp.float32
    if weight_dtype is not None:
        w1 = w1.astype(weight_dtype)
        w2 = w2.astype(weight_dtype)
        if jnp.dtype(weight_dtype).itemsize < 4:
            stream_dtype = jnp.dtype(weight_dtype)
    x_in = x.astype(stream_dtype)

    # Sublane multiple for the batch-tile rows (8 for fp32, 16 for bf16 sublane packing).
    row_mult = 8 * (4 // jnp.dtype(stream_dtype).itemsize)

    # 1-D params reshaped to [1, P] so everything in the kernel is 2-D; fp32 epilogue math.
    b1_2d = b1.reshape(1, P).astype(jnp.float32)
    b2_2d = b2.reshape(1, P).astype(jnp.float32)
    gamma_2d = gamma.reshape(1, P).astype(jnp.float32)
    beta_2d = beta.reshape(1, P).astype(jnp.float32)

    # Batch-tile selection: big tiles (>= ~512 rows when the batch allows it) to amortize
    # the ~0.35 us per-step overhead, but never a single tile when B is large enough to
    # split -> grid >= 2 keeps both v7x TensorCores busy (no effect on v5e/v6e).
    if block_rows is None:
        if B <= row_mult:
            tb = row_mult
        else:
            tb = min(1024, _round_up(pl.cdiv(B, 2), row_mult))
    else:
        tb = max(row_mult, _round_up(block_rows, row_mult))
    grid_rows = pl.cdiv(B, tb)  # ragged last block: Pallas pads reads / masks writes.

    # VMEM budget derived from the actual footprint (not a flat number):
    #   double-buffered streamed x + out, (conservatively) double-counted resident weights,
    #   fp32 intermediates (projected / g / h / centered), plus fixed headroom.
    itm = jnp.dtype(stream_dtype).itemsize
    x_bytes = tb * E * itm
    out_bytes = tb * P * jnp.dtype(out_dtype).itemsize
    w_bytes = (E * P + P * P) * jnp.dtype(w1.dtype).itemsize + 4 * P * 4
    interm_bytes = 4 * tb * P * 4
    vmem_bytes = 2 * (x_bytes + out_bytes) + 2 * w_bytes + interm_bytes + (4 << 20)
    vmem_limit = int(min(max(vmem_bytes, 16 << 20), 56 << 20))  # stay under v7x's 64 MiB

    # Advisory cost hint for the XLA scheduler around the custom call.
    cost = pl.CostEstimate(
        flops=2 * B * (E * P + P * P),
        transcendentals=B * P,  # erf over the [B, P] activation
        bytes_accessed=int(B * E * itm + B * P * jnp.dtype(out_dtype).itemsize
                           + (E * P + P * P) * jnp.dtype(w1.dtype).itemsize + 4 * P * 4),
    )

    vmem = pltpu.MemorySpace.VMEM
    in_specs = [
        # Batch-tiled streamed activations: double-buffered across grid steps.
        pl.BlockSpec((tb, E), lambda i: (i, 0), memory_space=vmem),
        # Weights / biases / LN params: constant block index -> VMEM-resident, one DMA/call.
        pl.BlockSpec((E, P), lambda i: (0, 0), memory_space=vmem),
        pl.BlockSpec((1, P), lambda i: (0, 0), memory_space=vmem),
        pl.BlockSpec((P, P), lambda i: (0, 0), memory_space=vmem),
        pl.BlockSpec((1, P), lambda i: (0, 0), memory_space=vmem),
        pl.BlockSpec((1, P), lambda i: (0, 0), memory_space=vmem),
        pl.BlockSpec((1, P), lambda i: (0, 0), memory_space=vmem),
    ]
    out_spec = pl.BlockSpec((tb, P), lambda i: (i, 0), memory_space=vmem)

    out = pl.pallas_call(
        projection_head_kernel,
        out_shape=jax.ShapeDtypeStruct((B, P), out_dtype),
        grid=(grid_rows,),
        in_specs=in_specs,
        out_specs=out_spec,
        compiler_params=pltpu.CompilerParams(
            # Independent batch tiles -> shard across v7x's 2 TensorCores.
            dimension_semantics=("parallel",),
            vmem_limit_bytes=vmem_limit,
        ),
        cost_estimate=cost,
    )(x_in, w1, b1_2d, w2, b2_2d, gamma_2d, beta_2d)
    return out


def reference(x, w1, b1, w2, b2, gamma, beta):
    projected = x @ w1 + b1
    g = jax.nn.gelu(projected, approximate=False)
    h = g @ w2 + b2
    h = h + projected
    mean = jnp.mean(h, axis=-1, keepdims=True)
    var = jnp.mean((h - mean) ** 2, axis=-1, keepdims=True)
    return (h - mean) / jnp.sqrt(var + EPS) * gamma + beta


if __name__ == "__main__":
    B = 20           # batch (small; deliberately not a multiple of the tile -> ragged block)
    E = 128          # embedding_dim (CFG.eeg_embedding_dim)
    P = 256          # projection_dim (CFG.projection_dim)

    key = jax.random.PRNGKey(0)
    kx, kw1, kb1, kw2, kb2 = jax.random.split(key, 5)

    x = jax.random.normal(kx, (B, E), dtype=jnp.float32)

    # Deterministic parameter init (Kaiming-uniform-ish ranges like nn.Linear).
    lim1 = 1.0 / jnp.sqrt(jnp.float32(E))
    w1 = jax.random.uniform(kw1, (E, P), minval=-lim1, maxval=lim1, dtype=jnp.float32)
    b1 = jax.random.uniform(kb1, (P,), minval=-lim1, maxval=lim1, dtype=jnp.float32)
    lim2 = 1.0 / jnp.sqrt(jnp.float32(P))
    w2 = jax.random.uniform(kw2, (P, P), minval=-lim2, maxval=lim2, dtype=jnp.float32)
    b2 = jax.random.uniform(kb2, (P,), minval=-lim2, maxval=lim2, dtype=jnp.float32)
    gamma = jnp.ones((P,), dtype=jnp.float32)   # LayerNorm weight init
    beta = jnp.zeros((P,), dtype=jnp.float32)   # LayerNorm bias init

    ref = reference(x, w1, b1, w2, b2, gamma, beta)

    # fp32 path, default tile policy: tb=16, grid=2 (exercises multi-step grid, the
    # "parallel" batch axis, and the ragged/masked last block since 20 % 16 != 0).
    out = projection_head(x, w1, b1, w2, b2, gamma, beta)
    out = jax.block_until_ready(out)
    assert out.shape == (B, P)
    assert jnp.allclose(out, ref, atol=1e-4, rtol=1e-4), "fp32 mismatch vs reference"

    # Explicit small block_rows: forces a different tiling, same result.
    out_t8 = projection_head(x, w1, b1, w2, b2, gamma, beta, block_rows=8)
    out_t8 = jax.block_until_ready(out_t8)
    assert jnp.allclose(out_t8, ref, atol=1e-4, rtol=1e-4), "fp32 (tb=8) mismatch"

    # bf16 fast path: weights AND streamed x in bf16 (halved HBM traffic), fp32 epilogue.
    out_bf16 = projection_head(x, w1, b1, w2, b2, gamma, beta,
                               weight_dtype=jnp.bfloat16)
    out_bf16 = jax.block_until_ready(out_bf16)
    assert out_bf16.shape == (B, P)
    assert jnp.allclose(out_bf16, ref, atol=1.5e-1, rtol=0.0), "bf16 mismatch vs reference"

    print("KERNEL_OK")
</pallas_src>

<mosaic_0001>
module attributes {stable_mosaic.version = 11 : i64} {
  func.func @projection_head_kernel(%arg0: i32, %arg1: memref<16x128xf32, #tpu.memory_space<vmem>>, %arg2: memref<128x256xf32, #tpu.memory_space<vmem>>, %arg3: memref<1x256xf32, #tpu.memory_space<vmem>>, %arg4: memref<256x256xf32, #tpu.memory_space<vmem>>, %arg5: memref<1x256xf32, #tpu.memory_space<vmem>>, %arg6: memref<1x256xf32, #tpu.memory_space<vmem>>, %arg7: memref<1x256xf32, #tpu.memory_space<vmem>>, %arg8: memref<16x256xf32, #tpu.memory_space<vmem>>) attributes {dimension_semantics = [#tpu.dimension_semantics<parallel>], iteration_bounds = array<i64: 2>, scalar_prefetch = 0 : i64, scratch_operands = 0 : i64, tpu.core_type = #tpu.core_type<tc>, window_params = [{transform_indices = @transform_0, window_bounds = array<i64: 16, 128>}, {pipeline_mode = #tpu.pipeline_mode<synchronous>, transform_indices = @transform_1, window_bounds = array<i64: 128, 256>}, {pipeline_mode = #tpu.pipeline_mode<synchronous>, transform_indices = @transform_2, window_bounds = array<i64: 1, 256>}, {pipeline_mode = #tpu.pipeline_mode<synchronous>, transform_indices = @transform_3, window_bounds = array<i64: 256, 256>}, {pipeline_mode = #tpu.pipeline_mode<synchronous>, transform_indices = @transform_4, window_bounds = array<i64: 1, 256>}, {pipeline_mode = #tpu.pipeline_mode<synchronous>, transform_indices = @transform_5, window_bounds = array<i64: 1, 256>}, {pipeline_mode = #tpu.pipeline_mode<synchronous>, transform_indices = @transform_6, window_bounds = array<i64: 1, 256>}, {transform_indices = @transform_7, window_bounds = array<i64: 16, 256>}]} {
    %c0 = arith.constant 0 : index
    %c0_0 = arith.constant 0 : index
    %0 = vector.load %arg1[%c0, %c0_0] : memref<16x128xf32, #tpu.memory_space<vmem>>, vector<16x128xf32>
    %c0_1 = arith.constant 0 : index
    %c0_2 = arith.constant 0 : index
    %1 = vector.load %arg2[%c0_1, %c0_2] : memref<128x256xf32, #tpu.memory_space<vmem>>, vector<128x256xf32>
    %c0_3 = arith.constant 0 : index
    %c0_4 = arith.constant 0 : index
    %2 = vector.load %arg3[%c0_3, %c0_4] : memref<1x256xf32, #tpu.memory_space<vmem>>, vector<1x256xf32>
    %c0_5 = arith.constant 0 : index
    %c0_6 = arith.constant 0 : index
    %3 = vector.load %arg4[%c0_5, %c0_6] : memref<256x256xf32, #tpu.memory_space<vmem>>, vector<256x256xf32>
    %c0_7 = arith.constant 0 : index
    %c0_8 = arith.constant 0 : index
    %4 = vector.load %arg5[%c0_7, %c0_8] : memref<1x256xf32, #tpu.memory_space<vmem>>, vector<1x256xf32>
    %c0_9 = arith.constant 0 : index
    %c0_10 = arith.constant 0 : index
    %5 = vector.load %arg6[%c0_9, %c0_10] : memref<1x256xf32, #tpu.memory_space<vmem>>, vector<1x256xf32>
    %c0_11 = arith.constant 0 : index
    %c0_12 = arith.constant 0 : index
    %6 = vector.load %arg7[%c0_11, %c0_12] : memref<1x256xf32, #tpu.memory_space<vmem>>, vector<1x256xf32>
    %cst = arith.constant dense<0.000000e+00> : vector<16x256xf32>
    %7 = tpu.matmul %0, %1, %cst {dimension_numbers = #tpu.dot_dimension_numbers<[1], [0], [0], [1], [0, 0, 1, 1], [], []>} : vector<16x128xf32>, vector<128x256xf32>, vector<16x256xf32> -> vector<16x256xf32>
    %8 = vector.broadcast %2 : vector<1x256xf32> to vector<16x256xf32>
    %9 = arith.addf %7, %8 : vector<16x256xf32>
    %cst_13 = arith.constant 5.000000e-01 : f32
    %10 = vector.broadcast %cst_13 : f32 to vector<16x256xf32>
    %11 = arith.mulf %10, %9 : vector<16x256xf32>
    %cst_14 = arith.constant 0.707106769 : f32
    %12 = vector.broadcast %cst_14 : f32 to vector<16x256xf32>
    %13 = arith.mulf %9, %12 : vector<16x256xf32>
    %14 = math.erf %13 : vector<16x256xf32>
    %cst_15 = arith.constant 1.000000e+00 : f32
    %15 = vector.broadcast %cst_15 : f32 to vector<16x256xf32>
    %16 = arith.addf %15, %14 : vector<16x256xf32>
    %17 = arith.mulf %11, %16 : vector<16x256xf32>
    %cst_16 = arith.constant dense<0.000000e+00> : vector<16x256xf32>
    %18 = tpu.matmul %17, %3, %cst_16 {dimension_numbers = #tpu.dot_dimension_numbers<[1], [0], [0], [1], [0, 0, 1, 1], [], []>} : vector<16x256xf32>, vector<256x256xf32>, vector<16x256xf32> -> vector<16x256xf32>
    %19 = vector.broadcast %4 : vector<1x256xf32> to vector<16x256xf32>
    %20 = arith.addf %18, %19 : vector<16x256xf32>
    %21 = arith.addf %20, %9 : vector<16x256xf32>
    %cst_17 = arith.constant dense<0.000000e+00> : vector<16xf32>
    %22 = vector.multi_reduction <add>, %21, %cst_17 [1] : vector<16x256xf32> to vector<16xf32>
    %23 = vector.shape_cast %22 : vector<16xf32> to vector<16x1xf32>
    %cst_18 = arith.constant 2.560000e+02 : f32
    %24 = vector.broadcast %cst_18 : f32 to vector<16x1xf32>
    %25 = arith.divf %23, %24 : vector<16x1xf32>
    %26 = vector.broadcast %25 : vector<16x1xf32> to vector<16x256xf32>
    %27 = arith.subf %21, %26 : vector<16x256xf32>
    %28 = arith.mulf %27, %27 : vector<16x256xf32>
    %cst_19 = arith.constant dense<0.000000e+00> : vector<16xf32>
    %29 = vector.multi_reduction <add>, %28, %cst_19 [1] : vector<16x256xf32> to vector<16xf32>
    %30 = vector.shape_cast %29 : vector<16xf32> to vector<16x1xf32>
    %cst_20 = arith.constant 2.560000e+02 : f32
    %31 = vector.broadcast %cst_20 : f32 to vector<16x1xf32>
    %32 = arith.divf %30, %31 : vector<16x1xf32>
    %cst_21 = arith.constant 9.99999974E-6 : f32
    %33 = vector.broadcast %cst_21 : f32 to vector<16x1xf32>
    %34 = arith.addf %32, %33 : vector<16x1xf32>
    %35 = math.rsqrt %34 : vector<16x1xf32>
    %36 = vector.broadcast %35 : vector<16x1xf32> to vector<16x256xf32>
    %37 = arith.mulf %27, %36 : vector<16x256xf32>
    %38 = vector.broadcast %5 : vector<1x256xf32> to vector<16x256xf32>
    %39 = arith.mulf %37, %38 : vector<16x256xf32>
    %40 = vector.broadcast %6 : vector<1x256xf32> to vector<16x256xf32>
    %41 = arith.addf %39, %40 : vector<16x256xf32>
    %c0_22 = arith.constant 0 : index
    %c0_23 = arith.constant 0 : index
    %42 = vector.load %arg8[%c0_22, %c0_23] : memref<16x256xf32, #tpu.memory_space<vmem>>, vector<16x256xf32>
    tpu.vector_store %arg8[%c0_22, %c0_23], %41 {strides = array<i32>} : memref<16x256xf32, #tpu.memory_space<vmem>>, vector<16x256xf32>,
    return
  }
  func.func @transform_0(%arg0: i32) -> (i32, i32) {
    %c0_i32 = arith.constant 0 : i32
    %c0_i32_0 = arith.constant 0 : i32
    return %arg0, %c0_i32 : i32, i32
  }
  func.func @transform_1(%arg0: i32) -> (i32, i32) {
    %c0_i32 = arith.constant 0 : i32
    %c0_i32_0 = arith.constant 0 : i32
    %c0_i32_1 = arith.constant 0 : i32
    return %c0_i32, %c0_i32_0 : i32, i32
  }
  func.func @transform_2(%arg0: i32) -> (i32, i32) {
    %c0_i32 = arith.constant 0 : i32
    %c0_i32_0 = arith.constant 0 : i32
    %c0_i32_1 = arith.constant 0 : i32
    return %c0_i32, %c0_i32_0 : i32, i32
  }
  func.func @transform_3(%arg0: i32) -> (i32, i32) {
    %c0_i32 = arith.constant 0 : i32
    %c0_i32_0 = arith.constant 0 : i32
    %c0_i32_1 = arith.constant 0 : i32
    return %c0_i32, %c0_i32_0 : i32, i32
  }
  func.func @transform_4(%arg0: i32) -> (i32, i32) {
    %c0_i32 = arith.constant 0 : i32
    %c0_i32_0 = arith.constant 0 : i32
    %c0_i32_1 = arith.constant 0 : i32
    return %c0_i32, %c0_i32_0 : i32, i32
  }
  func.func @transform_5(%arg0: i32) -> (i32, i32) {
    %c0_i32 = arith.constant 0 : i32
    %c0_i32_0 = arith.constant 0 : i32
    %c0_i32_1 = arith.constant 0 : i32
    return %c0_i32, %c0_i32_0 : i32, i32
  }
  func.func @transform_6(%arg0: i32) -> (i32, i32) {
    %c0_i32 = arith.constant 0 : i32
    %c0_i32_0 = arith.constant 0 : i32
    %c0_i32_1 = arith.constant 0 : i32
    return %c0_i32, %c0_i32_0 : i32, i32
  }
  func.func @transform_7(%arg0: i32) -> (i32, i32) {
    %c0_i32 = arith.constant 0 : i32
    %c0_i32_0 = arith.constant 0 : i32
    return %arg0, %c0_i32 : i32, i32
  }
}

</mosaic_0001>

<llo_original>
// kernel: tpu_custom_call.1
$region0: #{tpu_custom_call.1}
  #allocation0 [shape = 'u32[]', space=smem, size = 0x4, offset = 0x4, fixed_abs, tag = 'smem constant byte address 0x4 - core index']
  #allocation1 [shape = 'u32[72,128]{1,0:T(1,128)}', space=vmem, size = 0x9000, scoped, tag = 'internal scratch']
  %s0 = inlined_call_operand.hbm [shape: f32[20,128], index: 0, kind: input, shape index: {}]
  %s1 = inlined_call_operand.hbm [shape: f32[128,256], index: 1, kind: input, shape index: {}]
  %s2 = inlined_call_operand.hbm [shape: f32[1,256], index: 2, kind: input, shape index: {}]
  %s3 = inlined_call_operand.hbm [shape: f32[256,256], index: 3, kind: input, shape index: {}]
  %s4 = inlined_call_operand.vmem [shape: f32[1,256], index: 4, kind: input, shape index: {}]
  %s5 = inlined_call_operand.vmem [shape: f32[1,256], index: 5, kind: input, shape index: {}]
  %s6 = inlined_call_operand.hbm [shape: f32[1,256], index: 6, kind: input, shape index: {}]
  %s7 = inlined_call_operand.hbm [shape: f32[20,256], index: 7, kind: output, shape index: {}]
  %s8 = sld [smem:[#allocation0]]
  $region81: #{tpu_custom_call.1} parent=0
    _
  %s10 = ssub.s32 1, %s8
  %s11 = scalar_select 0, %s10, %s8
  $region1: #{tpu_custom_call.1} parent=0
    #allocation2 [shape = 'u8[16384]{0}', space=vmem, size = 0x4000, scoped, tag = 'input window, operand 0']
    #allocation3 [shape = 's32[2]{0}', space=sflag, size = 0x8, scoped, tag = 'scoped memory for tpu_custom_call.1']
    #allocation4 [shape = 's32[2]{0}', space=sflag, size = 0x8, scoped, tag = 'scoped memory for tpu_custom_call.1']
    #allocation5 [shape = 'u8[131072]{0}', space=vmem, size = 0x20000, scoped, tag = 'input window, operand 1, single buffered']
    #allocation6 [shape = 's32[1]{0}', space=sflag, size = 0x4, scoped, tag = 'scoped memory for tpu_custom_call.1']
    #allocation7 [shape = 'u8[1024]{0}', space=vmem, size = 0x400, scoped, tag = 'input window, operand 2, single buffered']
    #allocation8 [shape = 'u8[262144]{0}', space=vmem, size = 0x40000, scoped, tag = 'input window, operand 3, single buffered']
    #allocation9 [shape = 's32[1]{0}', space=sflag, size = 0x4, scoped, tag = 'scoped memory for tpu_custom_call.1']
    #allocation10 [shape = 'u8[1024]{0}', space=vmem, size = 0x400, scoped, tag = 'input window, operand 6, single buffered']
    #allocation11 [shape = 'u8[32768]{0}', space=vmem, size = 0x8000, scoped, tag = 'output window, operand 0']
    %12 = vsyncpa [#allocation3], 0
    %s13 = scalar_lea.sflag [#allocation3], 1
    %14 = vsyncpa %s13, 0
    %15 = vsyncpa [#allocation6], 0
    %16 = vsyncpa [#allocation9], 0
    %17 = vsyncpa [#allocation4], 0
    %s18 = scalar_lea.sflag [#allocation4], 1
    %19 = vsyncpa %s18, 0
    loop: start=0, step=1, limit=4
    $region2: #{tpu_custom_call.1} parent=1 // loop_pre_header
      _
    $region3: #{tpu_custom_call.1} parent=1 // loop_header
      %s21 = sphi 0, %s25
      %p22 = scmp.ge.s32.totalorder %s21, 4
      %s31 = sphi 0, %s33
      %s34 = sphi 0, %s31
      %s35 = sphi 0, %s34
      %s51 = sphi 0, %s35
      %s55 = sphi 0, %s55
      %s57 = sphi 0, %s55
      %s58 = sphi 0, %s57
      %s72 = sphi 0, %s58
      %s76 = sphi 0, %s76
      %s78 = sphi 0, %s76
      %s79 = sphi 0, %s78
      %s93 = sphi 0, %s79
      %s97 = sphi 0, %s97
      %s99 = sphi 0, %s97
      %s100 = sphi 0, %s99
      %s114 = sphi 0, %s100
      %s118 = sphi 0, %s118
      %s120 = sphi 0, %s118
      %s121 = sphi 0, %s120
      %s135 = sphi 0, %s121
      %s139 = sphi 0, %s139
      %s141 = sphi 0, %s139
      %s142 = sphi 0, %s141
      %s156 = sphi 0, %s142
      %s160 = sphi 0, %s160
      %s162 = sphi 0, %s160
      %s163 = sphi 0, %s162
      %s177 = sphi 0, %s163
      %s183 = sphi 0, %s185
      %s186 = sphi 0, %s183
      %s187 = sphi 0, %s186
      %s203 = sphi 0, %s187
    $region4: #{tpu_custom_call.1} parent=1 // loop_header_branch
      %24 = sbr.rel (%p22) target = $region8
    $region5: #{tpu_custom_call.1} parent=1 // loop_body
      %s26 = ssub.s32 %s21, 1
      %s27 = ssub.s32 %s21, 2
      %s28 = sadd.s32 %s21, 1
      %s29 = ssub.s32 %s21, %s28
      %p30 = scmp.eq.s32.totalorder %s29, 0
      %s32 = sadd.s32 %s31, 1
      %s33 = scalar_select %p30, %s31, %s32
      %p36 = pneg %p30
      %p37 = scmp.eq.s32.totalorder %s21, 1
      %p38 = por %p36, %p37
      %p39 = scmp.ne.s32.totalorder %s31, %s34
      %p40 = scmp.eq.s32.totalorder %s21, 0
      %p41 = por %p39, %p40
      %p42 = scmp.ne.s32.totalorder %s31, %s34
      %p43 = scmp.eq.s32.totalorder %s26, 1
      %p44 = por %p42, %p43
      %p45 = scmp.ne.s32.totalorder %s34, %s35
      %p46 = scmp.eq.s32.totalorder %s26, 0
      %p47 = por %p45, %p46
      %p48 = scmp.ne.s32.totalorder %s34, %s35
      %p49 = scmp.eq.s32.totalorder %s27, 1
      %p50 = por %p48, %p49
      %p52 = scmp.ne.s32.totalorder %s35, %s51
      %p53 = scmp.eq.s32.totalorder %s27, 0
      %p54 = por %p52, %p53
      %s56 = sadd.s32 %s55, 1
      %p59 = scmp.eq.s32.totalorder %s21, 1
      %p60 = scmp.ne.s32.totalorder %s55, %s57
      %p61 = scmp.eq.s32.totalorder %s21, 0
      %p62 = por %p60, %p61
      %p63 = scmp.ne.s32.totalorder %s55, %s57
      %p64 = scmp.eq.s32.totalorder %s26, 1
      %p65 = por %p63, %p64
      %p66 = scmp.ne.s32.totalorder %s57, %s58
      %p67 = scmp.eq.s32.totalorder %s26, 0
      %p68 = por %p66, %p67
      %p69 = scmp.ne.s32.totalorder %s57, %s58
      %p70 = scmp.eq.s32.totalorder %s27, 1
      %p71 = por %p69, %p70
      %p73 = scmp.ne.s32.totalorder %s58, %s72
      %p74 = scmp.eq.s32.totalorder %s27, 0
      %p75 = por %p73, %p74
      %s77 = sadd.s32 %s76, 1
      %p80 = scmp.eq.s32.totalorder %s21, 1
      %p81 = scmp.ne.s32.totalorder %s76, %s78
      %p82 = scmp.eq.s32.totalorder %s21, 0
      %p83 = por %p81, %p82
      %p84 = scmp.ne.s32.totalorder %s76, %s78
      %p85 = scmp.eq.s32.totalorder %s26, 1
      %p86 = por %p84, %p85
      %p87 = scmp.ne.s32.totalorder %s78, %s79
      %p88 = scmp.eq.s32.totalorder %s26, 0
      %p89 = por %p87, %p88
      %p90 = scmp.ne.s32.totalorder %s78, %s79
      %p91 = scmp.eq.s32.totalorder %s27, 1
      %p92 = por %p90, %p91
      %p94 = scmp.ne.s32.totalorder %s79, %s93
      %p95 = scmp.eq.s32.totalorder %s27, 0
      %p96 = por %p94, %p95
      %s98 = sadd.s32 %s97, 1
      %p101 = scmp.eq.s32.totalorder %s21, 1
      %p102 = scmp.ne.s32.totalorder %s97, %s99
      %p103 = scmp.eq.s32.totalorder %s21, 0
      %p104 = por %p102, %p103
      %p105 = scmp.ne.s32.totalorder %s97, %s99
      %p106 = scmp.eq.s32.totalorder %s26, 1
      %p107 = por %p105, %p106
      %p108 = scmp.ne.s32.totalorder %s99, %s100
      %p109 = scmp.eq.s32.totalorder %s26, 0
      %p110 = por %p108, %p109
      %p111 = scmp.ne.s32.totalorder %s99, %s100
      %p112 = scmp.eq.s32.totalorder %s27, 1
      %p113 = por %p111, %p112
      %p115 = scmp.ne.s32.totalorder %s100, %s114
      %p116 = scmp.eq.s32.totalorder %s27, 0
      %p117 = por %p115, %p116
      %s119 = sadd.s32 %s118, 1
      %p122 = scmp.eq.s32.totalorder %s21, 1
      %p123 = scmp.ne.s32.totalorder %s118, %s120
      %p124 = scmp.eq.s32.totalorder %s21, 0
      %p125 = por %p123, %p124
      %p126 = scmp.ne.s32.totalorder %s118, %s120
      %p127 = scmp.eq.s32.totalorder %s26, 1
      %p128 = por %p126, %p127
      %p129 = scmp.ne.s32.totalorder %s120, %s121
      %p130 = scmp.eq.s32.totalorder %s26, 0
      %p131 = por %p129, %p130
      %p132 = scmp.ne.s32.totalorder %s120, %s121
      %p133 = scmp.eq.s32.totalorder %s27, 1
      %p134 = por %p132, %p133
      %p136 = scmp.ne.s32.totalorder %s121, %s135
      %p137 = scmp.eq.s32.totalorder %s27, 0
      %p138 = por %p136, %p137
      %s140 = sadd.s32 %s139, 1
      %p143 = scmp.eq.s32.totalorder %s21, 1
      %p144 = scmp.ne.s32.totalorder %s139, %s141
      %p145 = scmp.eq.s32.totalorder %s21, 0
      %p146 = por %p144, %p145
      %p147 = scmp.ne.s32.totalorder %s139, %s141
      %p148 = scmp.eq.s32.totalorder %s26, 1
      %p149 = por %p147, %p148
      %p150 = scmp.ne.s32.totalorder %s141, %s142
      %p151 = scmp.eq.s32.totalorder %s26, 0
      %p152 = por %p150, %p151
      %p153 = scmp.ne.s32.totalorder %s141, %s142
      %p154 = scmp.eq.s32.totalorder %s27, 1
      %p155 = por %p153, %p154
      %p157 = scmp.ne.s32.totalorder %s142, %s156
      %p158 = scmp.eq.s32.totalorder %s27, 0
      %p159 = por %p157, %p158
      %s161 = sadd.s32 %s160, 1
      %p164 = scmp.eq.s32.totalorder %s21, 1
      %p165 = scmp.ne.s32.totalorder %s160, %s162
      %p166 = scmp.eq.s32.totalorder %s21, 0
      %p167 = por %p165, %p166
      %p168 = scmp.ne.s32.totalorder %s160, %s162
      %p169 = scmp.eq.s32.totalorder %s26, 1
      %p170 = por %p168, %p169
      %p171 = scmp.ne.s32.totalorder %s162, %s163
      %p172 = scmp.eq.s32.totalorder %s26, 0
      %p173 = por %p171, %p172
      %p174 = scmp.ne.s32.totalorder %s162, %s163
      %p175 = scmp.eq.s32.totalorder %s27, 1
      %p176 = por %p174, %p175
      %p178 = scmp.ne.s32.totalorder %s163, %s177
      %p179 = scmp.eq.s32.totalorder %s27, 0
      %p180 = por %p178, %p179
      %s181 = ssub.s32 %s21, %s28
      %p182 = scmp.eq.s32.totalorder %s181, 0
      %s184 = sadd.s32 %s183, 1
      %s185 = scalar_select %p182, %s183, %s184
      %p188 = pneg %p182
      %p189 = scmp.eq.s32.totalorder %s21, 1
      %p190 = por %p188, %p189
      %p191 = scmp.ne.s32.totalorder %s183, %s186
      %p192 = scmp.eq.s32.totalorder %s21, 0
      %p193 = por %p191, %p192
      %p194 = scmp.ne.s32.totalorder %s183, %s186
      %p195 = scmp.eq.s32.totalorder %s26, 1
      %p196 = por %p194, %p195
      %p197 = scmp.ne.s32.totalorder %s186, %s187
      %p198 = scmp.eq.s32.totalorder %s26, 0
      %p199 = por %p197, %p198
      %p200 = scmp.ne.s32.totalorder %s186, %s187
      %p201 = scmp.eq.s32.totalorder %s27, 1
      %p202 = por %p200, %p201
      %p204 = scmp.ne.s32.totalorder %s187, %s203
      %p205 = scmp.eq.s32.totalorder %s27, 0
      %p206 = por %p204, %p205
      %p207 = scmp.le.s32.totalorder 1, %s21
      %p208 = scmp.lt.s32.totalorder %s21, 3
      %p209 = pnand %p207, %p208
      %p210 = pneg %p209
      // Predicated region
      $region9: #{tpu_custom_call.1} parent=5 // pred_check
        _
      $region10: #{tpu_custom_call.1} parent=5 // pred_check_branch
        %212 = sbr.rel (%p209) target = $region12
      $region11: #{tpu_custom_call.1} parent=5 // pred_region
        %s213 = ssub.s32 %s21, 1
        // Predicated region
        $region13: #{tpu_custom_call.1} parent=11 // pred_check
          %p214 = pneg %p68
        $region14: #{tpu_custom_call.1} parent=11 // pred_check_branch
          %216 = sbr.rel (%p214) target = $region16
        $region15: #{tpu_custom_call.1} parent=11 // pred_region
          %218 = vsyncadd [#allocation6], 0
          %s219 = sshll.u32 %s1, 4
          %s220 = int_to_ptr.hbm [resolvable:$true] %s219
          %s221 = sshll.u32 [#allocation5], 4
          %s222 = int_to_ptr.vmem [resolvable:$true] %s221
          %227 = dma.hbm_to_vmem [thread:$0]  %s220, 4096, %s222, [#allocation6], 256, 256, 16
        $region16: #{tpu_custom_call.1} parent=11 // pred_fallthru
          _
        // Predicated region
        $region17: #{tpu_custom_call.1} parent=11 // pred_check
          %p228 = pneg %p89
        $region18: #{tpu_custom_call.1} parent=11 // pred_check_branch
          %230 = sbr.rel (%p228) target = $region20
        $region19: #{tpu_custom_call.1} parent=11 // pred_region
          %232 = vsyncadd [#allocation6], 0
          %s234 = sshll.u32 %s2, 4
          %s235 = int_to_ptr.hbm [resolvable:$true] %s234
          %s236 = sshll.u32 [#allocation7], 4
          %s237 = int_to_ptr.vmem [resolvable:$true] %s236
          %239 = dma.hbm_to_vmem [thread:$0]  %s235, 32, %s237, [#allocation6]
        $region20: #{tpu_custom_call.1} parent=11 // pred_fallthru
          _
        // Predicated region
        $region21: #{tpu_custom_call.1} parent=11 // pred_check
          %p240 = pneg %p110
        $region22: #{tpu_custom_call.1} parent=11 // pred_check_branch
          %242 = sbr.rel (%p240) target = $region24
        $region23: #{tpu_custom_call.1} parent=11 // pred_region
          %244 = vsyncadd [#allocation9], 0
          %s245 = sshll.u32 %s3, 4
          %s246 = int_to_ptr.hbm [resolvable:$true] %s245
          %s247 = sshll.u32 [#allocation8], 4
          %s248 = int_to_ptr.vmem [resolvable:$true] %s247
          %253 = dma.hbm_to_vmem [thread:$0]  %s246, 8192, %s248, [#allocation9], 256, 256, 16
        $region24: #{tpu_custom_call.1} parent=11 // pred_fallthru
          _
        // Predicated region
        $region25: #{tpu_custom_call.1} parent=11 // pred_check
          %p254 = pneg %p131
        $region26: #{tpu_custom_call.1} parent=11 // pred_check_branch
          %256 = sbr.rel (%p254) target = $region28
        $region27: #{tpu_custom_call.1} parent=11 // pred_region
          _
        $region28: #{tpu_custom_call.1} parent=11 // pred_fallthru
          _
        // Predicated region
        $region29: #{tpu_custom_call.1} parent=11 // pred_check
          %p257 = pneg %p152
        $region30: #{tpu_custom_call.1} parent=11 // pred_check_branch
          %259 = sbr.rel (%p257) target = $region32
        $region31: #{tpu_custom_call.1} parent=11 // pred_region
          _
        $region32: #{tpu_custom_call.1} parent=11 // pred_fallthru
          _
        // Predicated region
        $region33: #{tpu_custom_call.1} parent=11 // pred_check
          %p260 = pneg %p173
        $region34: #{tpu_custom_call.1} parent=11 // pred_check_branch
          %262 = sbr.rel (%p260) target = $region36
        $region35: #{tpu_custom_call.1} parent=11 // pred_region
          %264 = vsyncadd [#allocation9], 0
          %s266 = sshll.u32 %s6, 4
          %s267 = int_to_ptr.hbm [resolvable:$true] %s266
          %s268 = sshll.u32 [#allocation10], 4
          %s269 = int_to_ptr.vmem [resolvable:$true] %s268
          %271 = dma.hbm_to_vmem [thread:$0]  %s267, 32, %s269, [#allocation9]
        $region36: #{tpu_custom_call.1} parent=11 // pred_fallthru
          _
      $region12: #{tpu_custom_call.1} parent=5 // pred_fallthru
        _
      %p272 = scmp.lt.s32.totalorder %s21, 2
      // Predicated region
      $region37: #{tpu_custom_call.1} parent=5 // pred_check
        %p273 = pneg %p272
      $region38: #{tpu_custom_call.1} parent=5 // pred_check_branch
        %275 = sbr.rel (%p273) target = $region40
      $region39: #{tpu_custom_call.1} parent=5 // pred_region
        // Predicated region
        $region41: #{tpu_custom_call.1} parent=39 // pred_check
          %p276 = pneg %p41
        $region42: #{tpu_custom_call.1} parent=39 // pred_check_branch
          %278 = sbr.rel (%p276) target = $region44
        $region43: #{tpu_custom_call.1} parent=39 // pred_region
          %s279 = sand.u32 %s31, 1
          %s280 = scalar_lea.sflag [#allocation3], %s279
          %s281 = sand.u32 %s31, 1
          %s282 = smul.addr %s281, 16
          %s283 = scalar_lea.vmem [#allocation2], %s282
          %s284 = smul.u32 2, %s21
          %s285 = ssub.s32 3, %s284
          %p286 = scmp.lt.s32.totalorder %s285, 2
          %s287 = scalar_select %p286, %s285, 2
          %s288 = smul.u32 8, %s287
          %s289 = ssub.s32 16, %s288
          %s290 = sshll.u32 %s289, 4
          %291 = vsyncadd %s280, %s290
          %p292 = scmp.ne.s32.totalorder 0, %s288
          %s293 = smul.addr %s284, 8
          %s294 = scalar_lea.hbm %s0, %s293
          %s295 = smul.u32 8, %s287
          %s296 = sshll.u32 %s294, 4
          %s297 = int_to_ptr.hbm [resolvable:$true] %s296
          %s298 = sshll.u32 %s283, 4
          %s299 = int_to_ptr.vmem [resolvable:$true] %s298
          %s300 = sshll.u32 %s295, 4
          %304 = dma.hbm_to_vmem [thread:$0]  (%p292), %s297, %s300, %s299, %s280, 128, 128, 8
        $region44: #{tpu_custom_call.1} parent=39 // pred_fallthru
          _
      $region40: #{tpu_custom_call.1} parent=5 // pred_fallthru
        _
      %p305 = scmp.le.s32.totalorder 1, %s21
      %p306 = scmp.lt.s32.totalorder %s21, 3
      %p307 = pnand %p305, %p306
      %p308 = pneg %p307
      // Predicated region
      $region45: #{tpu_custom_call.1} parent=5 // pred_check
        _
      $region46: #{tpu_custom_call.1} parent=5 // pred_check_branch
        %310 = sbr.rel (%p307) target = $region48
      $region47: #{tpu_custom_call.1} parent=5 // pred_region
        %s311 = ssub.s32 %s21, 1
        %s312 = sand.u32 %s34, 1
        %s313 = scalar_lea.sflag [#allocation3], %s312
        %s314 = sand.u32 %s34, 1
        %s315 = smul.addr %s314, 16
        %s316 = scalar_lea.vmem [#allocation2], %s315
        // Predicated region
        $region49: #{tpu_custom_call.1} parent=47 // pred_check
          %p317 = pneg %p47
        $region50: #{tpu_custom_call.1} parent=47 // pred_check_branch
          %319 = sbr.rel (%p317) target = $region52
        $region51: #{tpu_custom_call.1} parent=47 // pred_region
          %321 = dma.done %s313, 256
        $region52: #{tpu_custom_call.1} parent=47 // pred_fallthru
          _
        // Predicated region
        $region53: #{tpu_custom_call.1} parent=47 // pred_check
          %p322 = pneg %p68
        $region54: #{tpu_custom_call.1} parent=47 // pred_check_branch
          %324 = sbr.rel (%p322) target = $region56
        $region55: #{tpu_custom_call.1} parent=47 // pred_region
          %326 = dma.done [#allocation6], 4096
        $region56: #{tpu_custom_call.1} parent=47 // pred_fallthru
          _
        // Predicated region
        $region57: #{tpu_custom_call.1} parent=47 // pred_check
          %p327 = pneg %p89
        $region58: #{tpu_custom_call.1} parent=47 // pred_check_branch
          %329 = sbr.rel (%p327) target = $region60
        $region59: #{tpu_custom_call.1} parent=47 // pred_region
          %331 = dma.done [#allocation6], 32
        $region60: #{tpu_custom_call.1} parent=47 // pred_fallthru
          _
        // Predicated region
        $region61: #{tpu_custom_call.1} parent=47 // pred_check
          %p332 = pneg %p110
        $region62: #{tpu_custom_call.1} parent=47 // pred_check_branch
          %334 = sbr.rel (%p332) target = $region64
        $region63: #{tpu_custom_call.1} parent=47 // pred_region
          %336 = dma.done [#allocation9], 8192
        $region64: #{tpu_custom_call.1} parent=47 // pred_fallthru
          _
        // Predicated region
        $region65: #{tpu_custom_call.1} parent=47 // pred_check
          %p337 = pneg %p173
        $region66: #{tpu_custom_call.1} parent=47 // pred_check_branch
          %339 = sbr.rel (%p337) target = $region68
        $region67: #{tpu_custom_call.1} parent=47 // pred_region
          %341 = dma.done [#allocation9], 32
        $region68: #{tpu_custom_call.1} parent=47 // pred_fallthru
          _
        %s342 = sand.u32 %s34, 1
        %s343 = scalar_lea.sflag [#allocation3], %s342
        %s344 = sand.u32 %s34, 1
        %s345 = smul.addr %s344, 16
        %s346 = scalar_lea.vmem [#allocation2], %s345
        %p347 = pneg %p47
        %p348 = pneg %p44
        %p349 = pneg %p68
        %p350 = pneg %p65
        %p351 = pneg %p89
        %p352 = pneg %p86
        %p353 = pneg %p110
        %p354 = pneg %p107
        %p355 = pneg %p131
        %p356 = pneg %p128
        %p357 = pneg %p152
        %p358 = pneg %p149
        %p359 = pneg %p173
        %p360 = pneg %p170
        %p361 = pneg %p199
        %p362 = pneg %p196
        %s363 = sand.u32 %s186, 1
        %s364 = scalar_lea.sflag [#allocation4], %s363
        %s365 = sand.u32 %s186, 1
        %s366 = smul.addr %s365, 32
        %s367 = scalar_lea.vmem [#allocation11], %s366
        %s368 = smul.u32 2, %s26
        %s369 = ssub.s32 3, %s368
        %p370 = scmp.lt.s32.totalorder %s369, 2
        %s371 = scalar_select %p370, %s369, 2
        %s372 = smul.u32 8, %s371
        %s373 = smul.u32 2, %s26
        %s374 = ssub.s32 3, %s373
        %p375 = scmp.lt.s32.totalorder %s374, 2
        %s376 = scalar_select %p375, %s374, 2
        %s377 = smul.u32 8, %s376
        %s378 = smul.u32 %s377, 2
        %v379 = vld [vmem:[%s316] sm:$0xff]
        %v380 = vld [vmem:[%s316 + $0x8] sm:$0xff]
        %v381 = vld [vmem:[#allocation5] sm:$0xff]
        %v382 = vld [vmem:[#allocation5 + $0x8] sm:$0xff]
        %v383 = vld [vmem:[#allocation5 + $0x10] sm:$0xff]
        %v384 = vld [vmem:[#allocation5 + $0x18] sm:$0xff]
        %v385 = vld [vmem:[#allocation5 + $0x20] sm:$0xff]
        %v386 = vld [vmem:[#allocation5 + $0x28] sm:$0xff]
        %v387 = vld [vmem:[#allocation5 + $0x30] sm:$0xff]
        %v388 = vld [vmem:[#allocation5 + $0x38] sm:$0xff]
        %v389 = vld [vmem:[#allocation5 + $0x40] sm:$0xff]
        %v390 = vld [vmem:[#allocation5 + $0x48] sm:$0xff]
        %v391 = vld [vmem:[#allocation5 + $0x50] sm:$0xff]
        %v392 = vld [vmem:[#allocation5 + $0x58] sm:$0xff]
        %v393 = vld [vmem:[#allocation5 + $0x60] sm:$0xff]
        %v394 = vld [vmem:[#allocation5 + $0x68] sm:$0xff]
        %v395 = vld [vmem:[#allocation5 + $0x70] sm:$0xff]
        %v396 = vld [vmem:[#allocation5 + $0x78] sm:$0xff]
        %v397 = vld [vmem:[#allocation5 + $0x80] sm:$0xff]
        %v398 = vld [vmem:[#allocation5 + $0x88] sm:$0xff]
        %v399 = vld [vmem:[#allocation5 + $0x90] sm:$0xff]
        %v400 = vld [vmem:[#allocation5 + $0x98] sm:$0xff]
        %v401 = vld [vmem:[#allocation5 + $0xa0] sm:$0xff]
        %v402 = vld [vmem:[#allocation5 + $0xa8] sm:$0xff]
        %v403 = vld [vmem:[#allocation5 + $0xb0] sm:$0xff]
        %v404 = vld [vmem:[#allocation5 + $0xb8] sm:$0xff]
        %v405 = vld [vmem:[#allocation5 + $0xc0] sm:$0xff]
        %v406 = vld [vmem:[#allocation5 + $0xc8] sm:$0xff]
        %v407 = vld [vmem:[#allocation5 + $0xd0] sm:$0xff]
        %v408 = vld [vmem:[#allocation5 + $0xd8] sm:$0xff]
        %v409 = vld [vmem:[#allocation5 + $0xe0] sm:$0xff]
        %v410 = vld [vmem:[#allocation5 + $0xe8] sm:$0xff]
        %v411 = vld [vmem:[#allocation5 + $0xf0] sm:$0xff]
        %v412 = vld [vmem:[#allocation5 + $0xf8] sm:$0xff]
        %v413 = vld [vmem:[#allocation7] sm:$0x3]
        %v414 = vld [vmem:[#allocation8] sm:$0xff]
        %v415 = vld [vmem:[#allocation8 + $0x8] sm:$0xff]
        %v416 = vld [vmem:[#allocation8 + $0x10] sm:$0xff]
        %v417 = vld [vmem:[#allocation8 + $0x18] sm:$0xff]
        %v418 = vld [vmem:[#allocation8 + $0x20] sm:$0xff]
        %v419 = vld [vmem:[#allocation8 + $0x28] sm:$0xff]
        %v420 = vld [vmem:[#allocation8 + $0x30] sm:$0xff]
        %v421 = vld [vmem:[#allocation8 + $0x38] sm:$0xff]
        %v422 = vld [vmem:[#allocation8 + $0x40] sm:$0xff]
        %v423 = vld [vmem:[#allocation8 + $0x48] sm:$0xff]
        %v424 = vld [vmem:[#allocation8 + $0x50] sm:$0xff]
        %v425 = vld [vmem:[#allocation8 + $0x58] sm:$0xff]
        %v426 = vld [vmem:[#allocation8 + $0x60] sm:$0xff]
        %v427 = vld [vmem:[#allocation8 + $0x68] sm:$0xff]
        %v428 = vld [vmem:[#allocation8 + $0x70] sm:$0xff]
        %v429 = vld [vmem:[#allocation8 + $0x78] sm:$0xff]
        %v430 = vld [vmem:[#allocation8 + $0x80] sm:$0xff]
        %v431 = vld [vmem:[#allocation8 + $0x88] sm:$0xff]
        %v432 = vld [vmem:[#allocation8 + $0x90] sm:$0xff]
        %v433 = vld [vmem:[#allocation8 + $0x98] sm:$0xff]
        %v434 = vld [vmem:[#allocation8 + $0xa0] sm:$0xff]
        %v435 = vld [vmem:[#allocation8 + $0xa8] sm:$0xff]
        %v436 = vld [vmem:[#allocation8 + $0xb0] sm:$0xff]
        %v437 = vld [vmem:[#allocation8 + $0xb8] sm:$0xff]
        %v438 = vld [vmem:[#allocation8 + $0xc0] sm:$0xff]
        %v439 = vld [vmem:[#allocation8 + $0xc8] sm:$0xff]
        %v440 = vld [vmem:[#allocation8 + $0xd0] sm:$0xff]
        %v441 = vld [vmem:[#allocation8 + $0xd8] sm:$0xff]
        %v442 = vld [vmem:[#allocation8 + $0xe0] sm:$0xff]
        %v443 = vld [vmem:[#allocation8 + $0xe8] sm:$0xff]
        %v444 = vld [vmem:[#allocation8 + $0xf0] sm:$0xff]
        %v445 = vld [vmem:[#allocation8 + $0xf8] sm:$0xff]
        %v446 = vld [vmem:[#allocation8 + $0x100] sm:$0xff]
        %v447 = vld [vmem:[#allocation8 + $0x108] sm:$0xff]
        %v448 = vld [vmem:[#allocation8 + $0x110] sm:$0xff]
        %v449 = vld [vmem:[#allocation8 + $0x118] sm:$0xff]
        %v450 = vld [vmem:[#allocation8 + $0x120] sm:$0xff]
        %v451 = vld [vmem:[#allocation8 + $0x128] sm:$0xff]
        %v452 = vld [vmem:[#allocation8 + $0x130] sm:$0xff]
        %v453 = vld [vmem:[#allocation8 + $0x138] sm:$0xff]
        %v454 = vld [vmem:[#allocation8 + $0x140] sm:$0xff]
        %v455 = vld [vmem:[#allocation8 + $0x148] sm:$0xff]
        %v456 = vld [vmem:[#allocation8 + $0x150] sm:$0xff]
        %v457 = vld [vmem:[#allocation8 + $0x158] sm:$0xff]
        %v458 = vld [vmem:[#allocation8 + $0x160] sm:$0xff]
        %v459 = vld [vmem:[#allocation8 + $0x168] sm:$0xff]
        %v460 = vld [vmem:[#allocation8 + $0x170] sm:$0xff]
        %v461 = vld [vmem:[#allocation8 + $0x178] sm:$0xff]
        %v462 = vld [vmem:[#allocation8 + $0x180] sm:$0xff]
        %v463 = vld [vmem:[#allocation8 + $0x188] sm:$0xff]
        %v464 = vld [vmem:[#allocation8 + $0x190] sm:$0xff]
        %v465 = vld [vmem:[#allocation8 + $0x198] sm:$0xff]
        %v466 = vld [vmem:[#allocation8 + $0x1a0] sm:$0xff]
        %v467 = vld [vmem:[#allocation8 + $0x1a8] sm:$0xff]
        %v468 = vld [vmem:[#allocation8 + $0x1b0] sm:$0xff]
        %v469 = vld [vmem:[#allocation8 + $0x1b8] sm:$0xff]
        %v470 = vld [vmem:[#allocation8 + $0x1c0] sm:$0xff]
        %v471 = vld [vmem:[#allocation8 + $0x1c8] sm:$0xff]
        %v472 = vld [vmem:[#allocation8 + $0x1d0] sm:$0xff]
        %v473 = vld [vmem:[#allocation8 + $0x1d8] sm:$0xff]
        %v474 = vld [vmem:[#allocation8 + $0x1e0] sm:$0xff]
        %v475 = vld [vmem:[#allocation8 + $0x1e8] sm:$0xff]
        %v476 = vld [vmem:[#allocation8 + $0x1f0] sm:$0xff]
        %v477 = vld [vmem:[#allocation8 + $0x1f8] sm:$0xff]
        %v478 = vld [vmem:[%s4] sm:$0x3]
        %v479 = vld [vmem:[%s5] sm:$0x3]
        %v480 = vld [vmem:[#allocation10] sm:$0x3]
        %v482 = vperm.slane %v413, 0
        %v483 = vperm.slane %v413, 1
        %486 = vmatpush.msra.mxu0 %v411
        %487 = vmatpush.msra.mxu0 %v409
        %488 = vmatpush.msra.mxu0 %v407
        %489 = vmatpush.msra.mxu0 %v405
        %490 = vmatpush.msra.mxu0 %v403
        %491 = vmatpush.msra.mxu0 %v401
        %492 = vmatpush.msra.mxu0 %v399
        %493 = vmatpush.msra.mxu0 %v397
        %494 = vmatpush.msra.mxu0 %v395
        %495 = vmatpush.msra.mxu0 %v393
        %496 = vmatpush.msra.mxu0 %v391
        %497 = vmatpush.msra.mxu0 %v389
        %498 = vmatpush.msra.mxu0 %v387
        %499 = vmatpush.msra.mxu0 %v385
        %500 = vmatpush.msra.mxu0 %v383
        %501 = vmatpush.msra.mxu0 %v381
        %502 = vmatmul.f32.gmra.mxu0 %v379
        %v503 = vpop.f32.mrf.mxu0
        %v504 = vadd.f32 %v482, %v503
        %505 = vmatmul.f32.gmra.mxu0 %v380
        %v506 = vpop.f32.mrf.mxu0
        %v507 = vadd.f32 %v482, %v506
        %508 = vdwg.mxu0
        %509 = vmatpush.msra.mxu0 %v412
        %510 = vmatpush.msra.mxu0 %v410
        %511 = vmatpush.msra.mxu0 %v408
        %512 = vmatpush.msra.mxu0 %v406
        %513 = vmatpush.msra.mxu0 %v404
        %514 = vmatpush.msra.mxu0 %v402
        %515 = vmatpush.msra.mxu0 %v400
        %516 = vmatpush.msra.mxu0 %v398
        %517 = vmatpush.msra.mxu0 %v396
        %518 = vmatpush.msra.mxu0 %v394
        %519 = vmatpush.msra.mxu0 %v392
        %520 = vmatpush.msra.mxu0 %v390
        %521 = vmatpush.msra.mxu0 %v388
        %522 = vmatpush.msra.mxu0 %v386
        %523 = vmatpush.msra.mxu0 %v384
        %524 = vmatpush.msra.mxu0 %v382
        %525 = vmatmul.f32.gmra.mxu0 %v379
        %v526 = vpop.f32.mrf.mxu0
        %v527 = vadd.f32 %v483, %v526
        %528 = vmatmul.f32.gmra.mxu0 %v380
        %v529 = vpop.f32.mrf.mxu0
        %v530 = vadd.f32 %v483, %v529
        %531 = vdwg.mxu0
        %v532 = vmul.f32 %v504, 0.5
        %v533 = vmul.f32 %v527, 0.5
        %v534 = vmul.f32 %v507, 0.5
        %v535 = vmul.f32 %v530, 0.5
        %v536 = vmul.f32 %v504, 0.70710677
        %v537 = vmul.f32 %v527, 0.70710677
        %v538 = vmul.f32 %v507, 0.70710677
        %v539 = vmul.f32 %v530, 0.70710677
        %v540 = vmul.f32 %v536, %v536
        %v541 = vmin.f32 16.0, %v540
        %v542 = vmul.f32 %v541, 2.1237322e-06
        %v543 = vadd.f32 %v542, 0.00028619796
        %v544 = vmul.f32 %v541, %v543
        %v545 = vadd.f32 %v544, 0.0036580483
        %v546 = vmul.f32 %v541, %v545
        %v547 = vadd.f32 %v546, 0.05243302
        %v548 = vmul.f32 %v541, %v547
        %v549 = vadd.f32 %v548, 0.18741608
        %v550 = vmul.f32 %v541, %v549
        %v551 = vadd.f32 %v550, 1.1283791
        %v552 = vmul.f32 %v536, %v551
        %v553 = vmul.f32 %v541, 3.8918573e-05
        %v554 = vadd.f32 %v553, 0.001143296
        %v555 = vmul.f32 %v541, %v554
        %v556 = vadd.f32 %v555, 0.014752088
        %v557 = vmul.f32 %v541, %v556
        %v558 = vadd.f32 %v557, 0.112945676
        %v559 = vmul.f32 %v541, %v558
        %v560 = vadd.f32 %v559, 0.4994258
        %v561 = vmul.f32 %v541, %v560
        %v562 = vadd.f32 %v561, 1.0
        %v563 = vrcp.pop %v562
        %v564 = vmul.f32 %v562, %v563
        %v565 = vsub.f32 1.0, %v564
        %v566 = vmul.f32 %v563, %v565
        %v567 = vadd.f32 %v563, %v566
        %vm568 = vweird.f32 %v562
        %vm569 = vweird.f32 %v563
        %vm570 = vmor %vm568, %vm569
        %v571 = vsel %vm570, %v563, %v567
        %v572 = vand.u32 2147483647, %v562
        %vm573 = vcmp.eq.f32.partialorder %v572, 8.507059e+37
        %v574 = vand.u32 %v562, 2147483648
        %v575 = vor.u32 1.1754944e-38, %v574
        %v576 = vsel %vm573, %v575, %v571
        %v577 = vmul.f32 %v552, %v576
        %v578 = vmin.f32 %v577, 1.0
        %v579 = vmax.f32 %v578, -1.0
        %v580 = vmul.f32 %v537, %v537
        %v581 = vmin.f32 16.0, %v580
        %v582 = vmul.f32 %v581, 2.1237322e-06
        %v583 = vadd.f32 %v582, 0.00028619796
        %v584 = vmul.f32 %v581, %v583
        %v585 = vadd.f32 %v584, 0.0036580483
        %v586 = vmul.f32 %v581, %v585
        %v587 = vadd.f32 %v586, 0.05243302
        %v588 = vmul.f32 %v581, %v587
        %v589 = vadd.f32 %v588, 0.18741608
        %v590 = vmul.f32 %v581, %v589
        %v591 = vadd.f32 %v590, 1.1283791
        %v592 = vmul.f32 %v537, %v591
        %v593 = vmul.f32 %v581, 3.8918573e-05
        %v594 = vadd.f32 %v593, 0.001143296
        %v595 = vmul.f32 %v581, %v594
        %v596 = vadd.f32 %v595, 0.014752088
        %v597 = vmul.f32 %v581, %v596
        %v598 = vadd.f32 %v597, 0.112945676
        %v599 = vmul.f32 %v581, %v598
        %v600 = vadd.f32 %v599, 0.4994258
        %v601 = vmul.f32 %v581, %v600
        %v602 = vadd.f32 %v601, 1.0
        %v603 = vrcp.pop %v602
        %v604 = vmul.f32 %v602, %v603
        %v605 = vsub.f32 1.0, %v604
        %v606 = vmul.f32 %v603, %v605
        %v607 = vadd.f32 %v603, %v606
        %vm608 = vweird.f32 %v602
        %vm609 = vweird.f32 %v603
        %vm610 = vmor %vm608, %vm609
        %v611 = vsel %vm610, %v603, %v607
        %v612 = vand.u32 2147483647, %v602
        %vm613 = vcmp.eq.f32.partialorder %v612, 8.507059e+37
        %v614 = vand.u32 %v602, 2147483648
        %v615 = vor.u32 1.1754944e-38, %v614
        %v616 = vsel %vm613, %v615, %v611
        %v617 = vmul.f32 %v592, %v616
        %v618 = vmin.f32 %v617, 1.0
        %v619 = vmax.f32 %v618, -1.0
        %v620 = vmul.f32 %v538, %v538
        %v621 = vmin.f32 16.0, %v620
        %v622 = vmul.f32 %v621, 2.1237322e-06
        %v623 = vadd.f32 %v622, 0.00028619796
        %v624 = vmul.f32 %v621, %v623
        %v625 = vadd.f32 %v624, 0.0036580483
        %v626 = vmul.f32 %v621, %v625
        %v627 = vadd.f32 %v626, 0.05243302
        %v628 = vmul.f32 %v621, %v627
        %v629 = vadd.f32 %v628, 0.18741608
        %v630 = vmul.f32 %v621, %v629
        %v631 = vadd.f32 %v630, 1.1283791
        %v632 = vmul.f32 %v538, %v631
        %v633 = vmul.f32 %v621, 3.8918573e-05
        %v634 = vadd.f32 %v633, 0.001143296
        %v635 = vmul.f32 %v621, %v634
        %v636 = vadd.f32 %v635, 0.014752088
        %v637 = vmul.f32 %v621, %v636
        %v638 = vadd.f32 %v637, 0.112945676
        %v639 = vmul.f32 %v621, %v638
        %v640 = vadd.f32 %v639, 0.4994258
        %v641 = vmul.f32 %v621, %v640
        %v642 = vadd.f32 %v641, 1.0
        %v643 = vrcp.pop %v642
        %v644 = vmul.f32 %v642, %v643
        %v645 = vsub.f32 1.0, %v644
        %v646 = vmul.f32 %v643, %v645
        %v647 = vadd.f32 %v643, %v646
        %vm648 = vweird.f32 %v642
        %vm649 = vweird.f32 %v643
        %vm650 = vmor %vm648, %vm649
        %v651 = vsel %vm650, %v643, %v647
        %v652 = vand.u32 2147483647, %v642
        %vm653 = vcmp.eq.f32.partialorder %v652, 8.507059e+37
        %v654 = vand.u32 %v642, 2147483648
        %v655 = vor.u32 1.1754944e-38, %v654
        %v656 = vsel %vm653, %v655, %v651
        %v657 = vmul.f32 %v632, %v656
        %v658 = vmin.f32 %v657, 1.0
        %v659 = vmax.f32 %v658, -1.0
        %v660 = vmul.f32 %v539, %v539
        %v661 = vmin.f32 16.0, %v660
        %v662 = vmul.f32 %v661, 2.1237322e-06
        %v663 = vadd.f32 %v662, 0.00028619796
        %v664 = vmul.f32 %v661, %v663
        %v665 = vadd.f32 %v664, 0.0036580483
        %v666 = vmul.f32 %v661, %v665
        %v667 = vadd.f32 %v666, 0.05243302
        %v668 = vmul.f32 %v661, %v667
        %v669 = vadd.f32 %v668, 0.18741608
        %v670 = vmul.f32 %v661, %v669
        %v671 = vadd.f32 %v670, 1.1283791
        %v672 = vmul.f32 %v539, %v671
        %v673 = vmul.f32 %v661, 3.8918573e-05
        %v674 = vadd.f32 %v673, 0.001143296
        %v675 = vmul.f32 %v661, %v674
        %v676 = vadd.f32 %v675, 0.014752088
        %v677 = vmul.f32 %v661, %v676
        %v678 = vadd.f32 %v677, 0.112945676
        %v679 = vmul.f32 %v661, %v678
        %v680 = vadd.f32 %v679, 0.4994258
        %v681 = vmul.f32 %v661, %v680
        %v682 = vadd.f32 %v681, 1.0
        %v683 = vrcp.pop %v682
        %v684 = vmul.f32 %v682, %v683
        %v685 = vsub.f32 1.0, %v684
        %v686 = vmul.f32 %v683, %v685
        %v687 = vadd.f32 %v683, %v686
        %vm688 = vweird.f32 %v682
        %vm689 = vweird.f32 %v683
        %vm690 = vmor %vm688, %vm689
        %v691 = vsel %vm690, %v683, %v687
        %v692 = vand.u32 2147483647, %v682
        %vm693 = vcmp.eq.f32.partialorder %v692, 8.507059e+37
        %v694 = vand.u32 %v682, 2147483648
        %v695 = vor.u32 1.1754944e-38, %v694
        %v696 = vsel %vm693, %v695, %v691
        %v697 = vmul.f32 %v672, %v696
        %v698 = vmin.f32 %v697, 1.0
        %v699 = vmax.f32 %v698, -1.0
        %v700 = vadd.f32 %v579, 1.0
        %v701 = vadd.f32 %v619, 1.0
        %v702 = vadd.f32 %v659, 1.0
        %v703 = vadd.f32 %v699, 1.0
        %v704 = vmul.f32 %v532, %v700
        %v705 = vmul.f32 %v533, %v701
        %v706 = vmul.f32 %v534, %v702
        %v707 = vmul.f32 %v535, %v703
        %v709 = vperm.slane %v478, 0
        %v710 = vperm.slane %v478, 1
        %713 = vmatpush.msra.mxu0 %v444
        %714 = vmatpush.msra.mxu0 %v442
        %715 = vmatpush.msra.mxu0 %v440
        %716 = vmatpush.msra.mxu0 %v438
        %717 = vmatpush.msra.mxu0 %v436
        %718 = vmatpush.msra.mxu0 %v434
        %719 = vmatpush.msra.mxu0 %v432
        %720 = vmatpush.msra.mxu0 %v430
        %721 = vmatpush.msra.mxu0 %v428
        %722 = vmatpush.msra.mxu0 %v426
        %723 = vmatpush.msra.mxu0 %v424
        %724 = vmatpush.msra.mxu0 %v422
        %725 = vmatpush.msra.mxu0 %v420
        %726 = vmatpush.msra.mxu0 %v418
        %727 = vmatpush.msra.mxu0 %v416
        %728 = vmatpush.msra.mxu0 %v414
        %729 = vmatmul.f32.gmra.mxu0 %v704
        %v730 = vpop.f32.mrf.mxu0
        %v731 = vadd.f32 %v709, %v730
        %732 = vmatmul.f32.gmra.mxu0 %v706
        %v733 = vpop.f32.mrf.mxu0
        %v734 = vadd.f32 %v709, %v733
        %735 = vdwg.mxu0
        %736 = vmatpush.msra.mxu0 %v476
        %737 = vmatpush.msra.mxu0 %v474
        %738 = vmatpush.msra.mxu0 %v472
        %739 = vmatpush.msra.mxu0 %v470
        %740 = vmatpush.msra.mxu0 %v468
        %741 = vmatpush.msra.mxu0 %v466
        %742 = vmatpush.msra.mxu0 %v464
        %743 = vmatpush.msra.mxu0 %v462
        %744 = vmatpush.msra.mxu0 %v460
        %745 = vmatpush.msra.mxu0 %v458
        %746 = vmatpush.msra.mxu0 %v456
        %747 = vmatpush.msra.mxu0 %v454
        %748 = vmatpush.msra.mxu0 %v452
        %749 = vmatpush.msra.mxu0 %v450
        %750 = vmatpush.msra.mxu0 %v448
        %751 = vmatpush.msra.mxu0 %v446
        %752 = vmatmul.f32.gmra.mxu0 %v705
        %v753 = vpop.f32.mrf.mxu0
        %v754 = vadd.f32 %v731, %v753
        %755 = vmatmul.f32.gmra.mxu0 %v707
        %v756 = vpop.f32.mrf.mxu0
        %v757 = vadd.f32 %v734, %v756
        %758 = vdwg.mxu0
        %759 = vmatpush.msra.mxu0 %v445
        %760 = vmatpush.msra.mxu0 %v443
        %761 = vmatpush.msra.mxu0 %v441
        %762 = vmatpush.msra.mxu0 %v439
        %763 = vmatpush.msra.mxu0 %v437
        %764 = vmatpush.msra.mxu0 %v435
        %765 = vmatpush.msra.mxu0 %v433
        %766 = vmatpush.msra.mxu0 %v431
        %767 = vmatpush.msra.mxu0 %v429
        %768 = vmatpush.msra.mxu0 %v427
        %769 = vmatpush.msra.mxu0 %v425
        %770 = vmatpush.msra.mxu0 %v423
        %771 = vmatpush.msra.mxu0 %v421
        %772 = vmatpush.msra.mxu0 %v419
        %773 = vmatpush.msra.mxu0 %v417
        %774 = vmatpush.msra.mxu0 %v415
        %775 = vmatmul.f32.gmra.mxu0 %v704
        %v776 = vpop.f32.mrf.mxu0
        %v777 = vadd.f32 %v710, %v776
        %778 = vmatmul.f32.gmra.mxu0 %v706
        %v779 = vpop.f32.mrf.mxu0
        %v780 = vadd.f32 %v710, %v779
        %781 = vdwg.mxu0
        %782 = vmatpush.msra.mxu0 %v477
        %783 = vmatpush.msra.mxu0 %v475
        %784 = vmatpush.msra.mxu0 %v473
        %785 = vmatpush.msra.mxu0 %v471
        %786 = vmatpush.msra.mxu0 %v469
        %787 = vmatpush.msra.mxu0 %v467
        %788 = vmatpush.msra.mxu0 %v465
        %789 = vmatpush.msra.mxu0 %v463
        %790 = vmatpush.msra.mxu0 %v461
        %791 = vmatpush.msra.mxu0 %v459
        %792 = vmatpush.msra.mxu0 %v457
        %793 = vmatpush.msra.mxu0 %v455
        %794 = vmatpush.msra.mxu0 %v453
        %795 = vmatpush.msra.mxu0 %v451
        %796 = vmatpush.msra.mxu0 %v449
        %797 = vmatpush.msra.mxu0 %v447
        %798 = vmatmul.f32.gmra.mxu0 %v705
        %v799 = vpop.f32.mrf.mxu0
        %v800 = vadd.f32 %v777, %v799
        %801 = vmatmul.f32.gmra.mxu0 %v707
        %v802 = vpop.f32.mrf.mxu0
        %v803 = vadd.f32 %v780, %v802
        %804 = vdwg.mxu0
        %v805 = vadd.f32 %v754, %v504
        %v806 = vadd.f32 %v800, %v527
        %v807 = vadd.f32 %v757, %v507
        %v808 = vadd.f32 %v803, %v530
        %v809 = vadd.f32 %v805, %v806
        %810 = vadd.xlane.f32.xlu0 %v809
        %v811 = vpop.xlane.xlu0 %810
        %v812 = vadd.f32 %v807, %v808
        %813 = vadd.xlane.f32.xlu0 %v812
        %v814 = vpop.xlane.xlu0 %813
        %v815 = vrcp.pop 256.0
        %v816 = vmul.f32 256.0, %v815
        %v817 = vsub.f32 1.0, %v816
        %v818 = vmul.f32 %v815, %v817
        %v819 = vadd.f32 %v815, %v818
        %vm820 = vweird.f32 %v815
        %v821 = vsel %vm820, %v815, %v819
        %v822 = vmul.f32 %v811, %v821
        %v823 = vmul.f32 %v814, %v821
        %v824 = vsub.f32 %v805, %v822
        %v825 = vsub.f32 %v806, %v822
        %v826 = vsub.f32 %v807, %v823
        %v827 = vsub.f32 %v808, %v823
        %v828 = vmul.f32 %v824, %v824
        %v829 = vmul.f32 %v825, %v825
        %v830 = vmul.f32 %v826, %v826
        %v831 = vmul.f32 %v827, %v827
        %v832 = vadd.f32 %v828, %v829
        %833 = vadd.xlane.f32.xlu0 %v832
        %v834 = vpop.xlane.xlu0 %833
        %v835 = vadd.f32 %v830, %v831
        %836 = vadd.xlane.f32.xlu0 %v835
        %v837 = vpop.xlane.xlu0 %836
        %v838 = vmul.f32 %v834, %v821
        %v839 = vmul.f32 %v837, %v821
        %v840 = vadd.f32 %v838, 1e-05
        %v841 = vadd.f32 %v839, 1e-05
        %v842 = vrsqrt.pop %v840
        %v843 = vmul.f32 %v842, %v840
        %v844 = vmul.f32 %v843, %v842
        %v845 = vmul.f32 0.5, %v844
        %v846 = vsub.f32 1.5, %v845
        %v847 = vmul.f32 %v842, %v846
        %vm848 = vweird.f32 %v840
        %vm849 = vweird.f32 %v842
        %vm850 = vmor %vm848, %vm849
        %v851 = vsel %vm850, %v842, %v847
        %v852 = vrsqrt.pop %v841
        %v853 = vmul.f32 %v852, %v841
        %v854 = vmul.f32 %v853, %v852
        %v855 = vmul.f32 0.5, %v854
        %v856 = vsub.f32 1.5, %v855
        %v857 = vmul.f32 %v852, %v856
        %vm858 = vweird.f32 %v841
        %vm859 = vweird.f32 %v852
        %vm860 = vmor %vm858, %vm859
        %v861 = vsel %vm860, %v852, %v857
        %v862 = vmul.f32 %v824, %v851
        %v863 = vmul.f32 %v825, %v851
        %v864 = vmul.f32 %v826, %v861
        %v865 = vmul.f32 %v827, %v861
        %v867 = vperm.slane %v479, 0
        %v868 = vperm.slane %v479, 1
        %v871 = vmul.f32 %v862, %v867
        %v872 = vmul.f32 %v863, %v868
        %v873 = vmul.f32 %v864, %v867
        %v874 = vmul.f32 %v865, %v868
        %v876 = vperm.slane %v480, 0
        %v877 = vperm.slane %v480, 1
        %v880 = vadd.f32 %v871, %v876
        %v881 = vadd.f32 %v872, %v877
        %v882 = vadd.f32 %v873, %v876
        %v883 = vadd.f32 %v874, %v877
        %884 = vst [vmem:[%s367] sm:$0xff] %v880
        %885 = vst [vmem:[%s367 + $0x8] sm:$0xff] %v881
        %886 = vst [vmem:[%s367 + $0x10] sm:$0xff] %v882
        %887 = vst [vmem:[%s367 + $0x18] sm:$0xff] %v883
        %s888 = sand.u32 %s186, 1
        %s889 = scalar_lea.sflag [#allocation4], %s888
        %s890 = sand.u32 %s186, 1
        %s891 = smul.addr %s890, 32
        %s892 = scalar_lea.vmem [#allocation11], %s891
        // Predicated region
        $region69: #{tpu_custom_call.1} parent=47 // pred_check
          %p893 = pneg %p196
        $region70: #{tpu_custom_call.1} parent=47 // pred_check_branch
          %895 = sbr.rel (%p893) target = $region72
        $region71: #{tpu_custom_call.1} parent=47 // pred_region
          %s896 = smul.u32 2, %s26
          %s897 = ssub.s32 3, %s896
          %p898 = scmp.lt.s32.totalorder %s897, 2
          %s899 = scalar_select %p898, %s897, 2
          %s900 = smul.u32 8, %s899
          %s901 = smul.u32 %s900, 2
          %s902 = ssub.s32 32, %s901
          %s903 = sshll.u32 %s902, 4
          %904 = vsyncadd %s889, %s903
          %p905 = scmp.ne.s32.totalorder 0, %s901
          %s906 = smul.addr %s896, 2
          %s907 = smul.addr %s906, 8
          %s908 = scalar_lea.hbm %s7, %s907
          %s909 = smul.u32 16, %s899
          %s910 = sshll.u32 %s892, 4
          %s911 = int_to_ptr.vmem [resolvable:$true] %s910
          %s912 = sshll.u32 %s908, 4
          %s913 = int_to_ptr.hbm [resolvable:$true] %s912
          %s914 = sshll.u32 %s909, 4
          %918 = dma.vmem_to_hbm [thread:$0]  (%p905), %s911, %s914, %s913, %s889, 256, 256, 16
        $region72: #{tpu_custom_call.1} parent=47 // pred_fallthru
          _
      $region48: #{tpu_custom_call.1} parent=5 // pred_fallthru
        _
      %p919 = scmp.le.s32.totalorder 2, %s21
      // Predicated region
      $region73: #{tpu_custom_call.1} parent=5 // pred_check
        %p920 = pneg %p919
      $region74: #{tpu_custom_call.1} parent=5 // pred_check_branch
        %922 = sbr.rel (%p920) target = $region76
      $region75: #{tpu_custom_call.1} parent=5 // pred_region
        %s923 = ssub.s32 %s21, 2
        // Predicated region
        $region77: #{tpu_custom_call.1} parent=75 // pred_check
          %p924 = pneg %p202
        $region78: #{tpu_custom_call.1} parent=75 // pred_check_branch
          %926 = sbr.rel (%p924) target = $region80
        $region79: #{tpu_custom_call.1} parent=75 // pred_region
          %s927 = sand.u32 %s187, 1
          %s928 = scalar_lea.sflag [#allocation4], %s927
          %s929 = sand.u32 %s187, 1
          %s930 = smul.addr %s929, 32
          %s931 = scalar_lea.vmem [#allocation11], %s930
          %933 = dma.done %s928, 512
        $region80: #{tpu_custom_call.1} parent=75 // pred_fallthru
          _
      $region76: #{tpu_custom_call.1} parent=5 // pred_fallthru
        _
    $region6: #{tpu_custom_call.1} parent=1 // loop_footer
      %s25 = sadd.s32 1, %s21
    $region7: #{tpu_custom_call.1} parent=1 // loop_footer_branch
      %20 = sbr.rel target = $region3
    $region8: #{tpu_custom_call.1} parent=1 // loop_exit
      _
    %934 = vsyncpa [#allocation3], 1
    %s935 = scalar_lea.sflag [#allocation3], 1
    %936 = vsyncpa %s935, 1
    %937 = vsyncpa [#allocation6], 1
    %938 = vsyncpa [#allocation9], 1
    %939 = vsyncpa [#allocation4], 1
    %s940 = scalar_lea.sflag [#allocation4], 1
    %941 = vsyncpa %s940, 1

</llo_original>
